<compile_context>
chip_gen: v5e
topology: v5e:2x2
jax: 0.10.0
libtpu: 0.0.40
codegen_flags: <defaults>
</compile_context>

<pallas_src>
import jax
import jax.numpy as jnp
from jax.experimental import pallas as pl
from jax.experimental.pallas import tpu as pltpu

EPS = 1e-06


def triplet_loss_kernel(x_ref, y_ref, z_ref, w_ref, b_ref, sxy_ref, sxz_ref,
                        loss_ref):
    # x/y/z: (B, T, C*P) f32   w: (C*P, H)   b: (1, H)   sxy/sxz: (B, 1)   loss: (1, 1)
    B = x_ref.shape[0]
    inv_t = 1.0 / x_ref.shape[1]

    # Time mean hoisted before the projection (exact: the Linear is linear).
    mx = jnp.sum(x_ref[...], axis=1) * inv_t           # (B, C*P)
    my = jnp.sum(y_ref[...], axis=1) * inv_t
    mz = jnp.sum(z_ref[...], axis=1) * inv_t

    # One block-diagonal matmul == all 4 channel Linears + channel-wise concat.
    feats = jnp.concatenate([mx, my, mz], axis=0)      # (3B, C*P)
    emb = jnp.dot(feats, w_ref[...],
                  preferred_element_type=jnp.float32) + b_ref[...]   # (3B, H)
    ex, ey, ez = emb[:B], emb[B:2 * B], emb[2 * B:]

    # Fused epilogue: pairwise distances + log-ratio triplet loss.
    dxy = jnp.sqrt(jnp.sum((ex - ey) ** 2, axis=1, keepdims=True))   # (B, 1)
    dxz = jnp.sqrt(jnp.sum((ex - ez) ** 2, axis=1, keepdims=True))   # (B, 1)
    target = jnp.log((1.0 - sxy_ref[...] + EPS) / (1.0 - sxz_ref[...] + EPS))
    loss = (jnp.log(dxy / dxz) - target) ** 2                        # (B, 1)
    loss_ref[...] = jnp.sum(loss, axis=0, keepdims=True) * (1.0 / B)  # (1, 1)


def model_forward(data_x, data_y, data_z, sim_xy, sim_xz, w_blockdiag, bias_cat):
    """data_*: (B,T,C,H,W); sim_*: (B,); w_blockdiag: (C*H*W, hidden); bias_cat: (1, hidden)."""
    B, T, C, H, W = data_x.shape
    CP = C * H * W
    # torch.flatten(3, 4) + channel packing == one free contiguous reshape (no copy/transpose).
    x = data_x.reshape(B, T, CP)
    y = data_y.reshape(B, T, CP)
    z = data_z.reshape(B, T, CP)

    vmem = pl.BlockSpec(memory_space=pltpu.MemorySpace.VMEM)
    loss = pl.pallas_call(
        triplet_loss_kernel,
        out_shape=jax.ShapeDtypeStruct((1, 1), jnp.float32),
        in_specs=[vmem] * 7,
        out_specs=vmem,
    )(x, y, z, w_blockdiag, bias_cat,
      sim_xy.reshape(B, 1).astype(jnp.float32),
      sim_xz.reshape(B, 1).astype(jnp.float32))
    return loss[0, 0]


def init_params(key, P, hidden_dim, C=4):
    """Per-channel torch-style Linear params: U(-1/sqrt(P), 1/sqrt(P))."""
    D4 = hidden_dim // 4
    kw, kb = jax.random.split(key)
    bound = 1.0 / jnp.sqrt(jnp.float32(P))
    W = jax.random.uniform(kw, (C, P, D4), jnp.float32, -bound, bound)
    b = jax.random.uniform(kb, (C, D4), jnp.float32, -bound, bound)
    return W, b


def pack_block_diagonal(W, b):
    """(C, P, D4), (C, D4) -> block-diag weight (C*P, C*D4) and concat bias (1, C*D4)."""
    C, P, D4 = W.shape
    Wbd = jnp.zeros((C * P, C * D4), jnp.float32)
    for c in range(C):
        Wbd = Wbd.at[c * P:(c + 1) * P, c * D4:(c + 1) * D4].set(W[c])
    return Wbd, b.reshape(1, C * D4)


def reference_forward(data_x, data_y, data_z, sim_xy, sim_xz, W, b):
    """Pure-JAX mirror of the PyTorch module (per-channel Linear, concat, time mean)."""
    def embed(d):
        B, T, C, H, Wd = d.shape
        d = d.reshape(B, T, C, H * Wd)
        emb = jnp.concatenate(
            [d[:, :, c, :] @ W[c] + b[c] for c in range(C)], axis=2)   # (B, T, hidden)
        return jnp.mean(emb, axis=1)                                    # (B, hidden)
    ex, ey, ez = embed(data_x), embed(data_y), embed(data_z)
    dxy = jnp.sqrt(jnp.sum((ex - ey) ** 2, axis=1))
    dxz = jnp.sqrt(jnp.sum((ex - ez) ** 2, axis=1))
    loss = (jnp.log(dxy / dxz)
            - jnp.log((1.0 - sim_xy + EPS) / (1.0 - sim_xz + EPS))) ** 2
    return jnp.mean(loss)


if __name__ == "__main__":
    # video_size=(16,16), video_channels=4, video_length=8, hidden_dim=32, batch=2
    B, T, C, Hs, Ws = 2, 8, 4, 16, 16
    hidden_dim = 32
    P = Hs * Ws

    key = jax.random.PRNGKey(0)
    kx, ky, kz, ks1, ks2, kp = jax.random.split(key, 6)
    data_x = jax.random.normal(kx, (B, T, C, Hs, Ws), jnp.float32)
    data_y = jax.random.normal(ky, (B, T, C, Hs, Ws), jnp.float32)
    data_z = jax.random.normal(kz, (B, T, C, Hs, Ws), jnp.float32)
    sim_xy = jax.random.uniform(ks1, (B,), jnp.float32, 0.0, 0.9)
    sim_xz = jax.random.uniform(ks2, (B,), jnp.float32, 0.0, 0.9)

    W, bias = init_params(kp, P, hidden_dim, C)
    W_bd, b_cat = pack_block_diagonal(W, bias)   # one-time parameter packing

    loss = jax.jit(model_forward)(data_x, data_y, data_z, sim_xy, sim_xz, W_bd, b_cat)
    jax.block_until_ready(loss)

    ref = reference_forward(data_x, data_y, data_z, sim_xy, sim_xz, W, bias)
    assert loss.shape == () and bool(jnp.isfinite(loss))
    assert jnp.allclose(loss, ref, rtol=5e-3, atol=1e-4), (loss, ref)
    print("KERNEL_OK")
</pallas_src>

<mosaic_0001>
module attributes {stable_mosaic.version = 11 : i64} {
  func.func @triplet_loss_kernel(%arg0: memref<2x8x1024xf32, #tpu.memory_space<vmem>>, %arg1: memref<2x8x1024xf32, #tpu.memory_space<vmem>>, %arg2: memref<2x8x1024xf32, #tpu.memory_space<vmem>>, %arg3: memref<1024x32xf32, #tpu.memory_space<vmem>>, %arg4: memref<1x32xf32, #tpu.memory_space<vmem>>, %arg5: memref<2x1xf32, #tpu.memory_space<vmem>>, %arg6: memref<2x1xf32, #tpu.memory_space<vmem>>, %arg7: memref<1x1xf32, #tpu.memory_space<vmem>>) attributes {dimension_semantics = [], scalar_prefetch = 0 : i64, scratch_operands = 0 : i64, tpu.core_type = #tpu.core_type<tc>} {
    %c0 = arith.constant 0 : index
    %c0_0 = arith.constant 0 : index
    %c0_1 = arith.constant 0 : index
    %0 = vector.load %arg0[%c0, %c0_0, %c0_1] : memref<2x8x1024xf32, #tpu.memory_space<vmem>>, vector<2x8x1024xf32>
    %cst = arith.constant dense<0.000000e+00> : vector<2x1024xf32>
    %1 = vector.multi_reduction <add>, %0, %cst [1] : vector<2x8x1024xf32> to vector<2x1024xf32>
    %cst_2 = arith.constant 1.250000e-01 : f32
    %2 = vector.broadcast %cst_2 : f32 to vector<2x1024xf32>
    %3 = arith.mulf %1, %2 : vector<2x1024xf32>
    %c0_3 = arith.constant 0 : index
    %c0_4 = arith.constant 0 : index
    %c0_5 = arith.constant 0 : index
    %4 = vector.load %arg1[%c0_3, %c0_4, %c0_5] : memref<2x8x1024xf32, #tpu.memory_space<vmem>>, vector<2x8x1024xf32>
    %cst_6 = arith.constant dense<0.000000e+00> : vector<2x1024xf32>
    %5 = vector.multi_reduction <add>, %4, %cst_6 [1] : vector<2x8x1024xf32> to vector<2x1024xf32>
    %cst_7 = arith.constant 1.250000e-01 : f32
    %6 = vector.broadcast %cst_7 : f32 to vector<2x1024xf32>
    %7 = arith.mulf %5, %6 : vector<2x1024xf32>
    %c0_8 = arith.constant 0 : index
    %c0_9 = arith.constant 0 : index
    %c0_10 = arith.constant 0 : index
    %8 = vector.load %arg2[%c0_8, %c0_9, %c0_10] : memref<2x8x1024xf32, #tpu.memory_space<vmem>>, vector<2x8x1024xf32>
    %cst_11 = arith.constant dense<0.000000e+00> : vector<2x1024xf32>
    %9 = vector.multi_reduction <add>, %8, %cst_11 [1] : vector<2x8x1024xf32> to vector<2x1024xf32>
    %cst_12 = arith.constant 1.250000e-01 : f32
    %10 = vector.broadcast %cst_12 : f32 to vector<2x1024xf32>
    %11 = arith.mulf %9, %10 : vector<2x1024xf32>
    %12 = tpu.concatenate %3, %7, %11 in 0 : vector<2x1024xf32>, vector<2x1024xf32>, vector<2x1024xf32> -> vector<6x1024xf32>
    %c0_13 = arith.constant 0 : index
    %c0_14 = arith.constant 0 : index
    %13 = vector.load %arg3[%c0_13, %c0_14] : memref<1024x32xf32, #tpu.memory_space<vmem>>, vector<1024x32xf32>
    %cst_15 = arith.constant dense<0.000000e+00> : vector<6x32xf32>
    %14 = tpu.matmul %12, %13, %cst_15 {dimension_numbers = #tpu.dot_dimension_numbers<[1], [0], [0], [1], [0, 0, 1, 1], [], []>} : vector<6x1024xf32>, vector<1024x32xf32>, vector<6x32xf32> -> vector<6x32xf32>
    %c0_16 = arith.constant 0 : index
    %c0_17 = arith.constant 0 : index
    %15 = vector.load %arg4[%c0_16, %c0_17] : memref<1x32xf32, #tpu.memory_space<vmem>>, vector<1x32xf32>
    %16 = vector.broadcast %15 : vector<1x32xf32> to vector<6x32xf32>
    %17 = arith.addf %14, %16 : vector<6x32xf32>
    %18 = vector.extract_strided_slice %17 {offsets = [0, 0], sizes = [2, 32], strides = [1, 1]} : vector<6x32xf32> to vector<2x32xf32>
    %19 = vector.extract_strided_slice %17 {offsets = [2, 0], sizes = [2, 32], strides = [1, 1]} : vector<6x32xf32> to vector<2x32xf32>
    %20 = vector.extract_strided_slice %17 {offsets = [4, 0], sizes = [2, 32], strides = [1, 1]} : vector<6x32xf32> to vector<2x32xf32>
    %21 = arith.subf %18, %19 : vector<2x32xf32>
    %22 = arith.mulf %21, %21 : vector<2x32xf32>
    %cst_18 = arith.constant dense<0.000000e+00> : vector<2xf32>
    %23 = vector.multi_reduction <add>, %22, %cst_18 [1] : vector<2x32xf32> to vector<2xf32>
    %24 = vector.shape_cast %23 : vector<2xf32> to vector<2x1xf32>
    %25 = math.sqrt %24 : vector<2x1xf32>
    %26 = arith.subf %18, %20 : vector<2x32xf32>
    %27 = arith.mulf %26, %26 : vector<2x32xf32>
    %cst_19 = arith.constant dense<0.000000e+00> : vector<2xf32>
    %28 = vector.multi_reduction <add>, %27, %cst_19 [1] : vector<2x32xf32> to vector<2xf32>
    %29 = vector.shape_cast %28 : vector<2xf32> to vector<2x1xf32>
    %30 = math.sqrt %29 : vector<2x1xf32>
    %c0_20 = arith.constant 0 : index
    %c0_21 = arith.constant 0 : index
    %31 = vector.load %arg5[%c0_20, %c0_21] : memref<2x1xf32, #tpu.memory_space<vmem>>, vector<2x1xf32>
    %cst_22 = arith.constant 1.000000e+00 : f32
    %32 = vector.broadcast %cst_22 : f32 to vector<2x1xf32>
    %33 = arith.subf %32, %31 : vector<2x1xf32>
    %cst_23 = arith.constant 9.99999997E-7 : f32
    %34 = vector.broadcast %cst_23 : f32 to vector<2x1xf32>
    %35 = arith.addf %33, %34 : vector<2x1xf32>
    %c0_24 = arith.constant 0 : index
    %c0_25 = arith.constant 0 : index
    %36 = vector.load %arg6[%c0_24, %c0_25] : memref<2x1xf32, #tpu.memory_space<vmem>>, vector<2x1xf32>
    %cst_26 = arith.constant 1.000000e+00 : f32
    %37 = vector.broadcast %cst_26 : f32 to vector<2x1xf32>
    %38 = arith.subf %37, %36 : vector<2x1xf32>
    %cst_27 = arith.constant 9.99999997E-7 : f32
    %39 = vector.broadcast %cst_27 : f32 to vector<2x1xf32>
    %40 = arith.addf %38, %39 : vector<2x1xf32>
    %41 = arith.divf %35, %40 : vector<2x1xf32>
    %42 = math.log %41 : vector<2x1xf32>
    %43 = arith.divf %25, %30 : vector<2x1xf32>
    %44 = math.log %43 : vector<2x1xf32>
    %45 = arith.subf %44, %42 : vector<2x1xf32>
    %46 = arith.mulf %45, %45 : vector<2x1xf32>
    %cst_28 = arith.constant dense<0.000000e+00> : vector<1xf32>
    %47 = vector.multi_reduction <add>, %46, %cst_28 [0] : vector<2x1xf32> to vector<1xf32>
    %48 = vector.shape_cast %47 : vector<1xf32> to vector<1x1xf32>
    %cst_29 = arith.constant 5.000000e-01 : f32
    %49 = vector.broadcast %cst_29 : f32 to vector<1x1xf32>
    %50 = arith.mulf %48, %49 : vector<1x1xf32>
    %c0_30 = arith.constant 0 : index
    %c0_31 = arith.constant 0 : index
    %51 = vector.load %arg7[%c0_30, %c0_31] : memref<1x1xf32, #tpu.memory_space<vmem>>, vector<1x1xf32>
    tpu.vector_store %arg7[%c0_30, %c0_31], %50 {strides = array<i32>} : memref<1x1xf32, #tpu.memory_space<vmem>>, vector<1x1xf32>,
    return
  }
}

</mosaic_0001>

<llo_original>
// kernel: model_forward.1
$region0: #{model_forward.1}
  #allocation0 [shape = 'u32[]', space=smem, size = 0x4, offset = 0x4, fixed_abs, tag = 'smem constant byte address 0x4 - core index']
  #allocation1 [shape = 'u32[72,128]{1,0:T(1,128)}', space=vmem, size = 0x9000, scoped, tag = 'internal scratch']
  %s0 = inlined_call_operand.vmem [shape: f32[2,8,1024], index: 0, kind: input, shape index: {}]
  %s1 = inlined_call_operand.vmem [shape: f32[2,8,1024], index: 1, kind: input, shape index: {}]
  %s2 = inlined_call_operand.vmem [shape: f32[2,8,1024], index: 2, kind: input, shape index: {}]
  %s3 = inlined_call_operand.vmem [shape: f32[1024,32], index: 3, kind: input, shape index: {}]
  %s4 = inlined_call_operand.vmem [shape: f32[1,32], index: 4, kind: input, shape index: {}]
  %s5 = inlined_call_operand.vmem [shape: f32[2,1], index: 5, kind: input, shape index: {}]
  %s6 = inlined_call_operand.vmem [shape: f32[2,1], index: 6, kind: input, shape index: {}]
  %s7 = inlined_call_operand.hbm [shape: f32[1,1], index: 7, kind: output, shape index: {}]
  %s8 = sld [smem:[#allocation0]]
  $region38: #{model_forward.1} parent=0
    _
  %s10 = ssub.s32 1, %s8
  %s11 = scalar_select 0, %s10, %s8
  $region1: #{model_forward.1} parent=0
    #allocation2 [shape = 'u8[512]{0}', space=vmem, size = 0x400, scoped, tag = 'output window, operand 0, single buffered']
    #allocation3 [shape = 's32[1]{0}', space=sflag, size = 0x4, scoped, tag = 'scoped memory for model_forward.1']
    %12 = vsyncpa [#allocation3], 0
    // Predicated region
    $region2: #{model_forward.1} parent=1 // pred_check
      _
    $region3: #{model_forward.1} parent=1 // pred_check_branch
      %14 = sbr.rel (0) target = $region5
    $region4: #{model_forward.1} parent=1 // pred_region
      _
    $region5: #{model_forward.1} parent=1 // pred_fallthru
      _
    // Predicated region
    $region6: #{model_forward.1} parent=1 // pred_check
      _
    $region7: #{model_forward.1} parent=1 // pred_check_branch
      %16 = sbr.rel (0) target = $region9
    $region8: #{model_forward.1} parent=1 // pred_region
      _
    $region9: #{model_forward.1} parent=1 // pred_fallthru
      _
    // Predicated region
    $region10: #{model_forward.1} parent=1 // pred_check
      _
    $region11: #{model_forward.1} parent=1 // pred_check_branch
      %18 = sbr.rel (0) target = $region13
    $region12: #{model_forward.1} parent=1 // pred_region
      _
    $region13: #{model_forward.1} parent=1 // pred_fallthru
      _
    // Predicated region
    $region14: #{model_forward.1} parent=1 // pred_check
      _
    $region15: #{model_forward.1} parent=1 // pred_check_branch
      %20 = sbr.rel (0) target = $region17
    $region16: #{model_forward.1} parent=1 // pred_region
      _
    $region17: #{model_forward.1} parent=1 // pred_fallthru
      _
    // Predicated region
    $region18: #{model_forward.1} parent=1 // pred_check
      _
    $region19: #{model_forward.1} parent=1 // pred_check_branch
      %22 = sbr.rel (0) target = $region21
    $region20: #{model_forward.1} parent=1 // pred_region
      _
    $region21: #{model_forward.1} parent=1 // pred_fallthru
      _
    // Predicated region
    $region22: #{model_forward.1} parent=1 // pred_check
      _
    $region23: #{model_forward.1} parent=1 // pred_check_branch
      %24 = sbr.rel (0) target = $region25
    $region24: #{model_forward.1} parent=1 // pred_region
      _
    $region25: #{model_forward.1} parent=1 // pred_fallthru
      _
    // Predicated region
    $region26: #{model_forward.1} parent=1 // pred_check
      _
    $region27: #{model_forward.1} parent=1 // pred_check_branch
      %26 = sbr.rel (0) target = $region29
    $region28: #{model_forward.1} parent=1 // pred_region
      _
    $region29: #{model_forward.1} parent=1 // pred_fallthru
      _
    %v27 = vld [vmem:[%s0] sm:$0xff]
    %v28 = vld [vmem:[%s0 + $0x8] sm:$0xff]
    %v29 = vld [vmem:[%s0 + $0x10] sm:$0xff]
    %v30 = vld [vmem:[%s0 + $0x18] sm:$0xff]
    %v31 = vld [vmem:[%s0 + $0x20] sm:$0xff]
    %v32 = vld [vmem:[%s0 + $0x28] sm:$0xff]
    %v33 = vld [vmem:[%s0 + $0x30] sm:$0xff]
    %v34 = vld [vmem:[%s0 + $0x38] sm:$0xff]
    %v35 = vld [vmem:[%s0 + $0x40] sm:$0xff]
    %v36 = vld [vmem:[%s0 + $0x48] sm:$0xff]
    %v37 = vld [vmem:[%s0 + $0x50] sm:$0xff]
    %v38 = vld [vmem:[%s0 + $0x58] sm:$0xff]
    %v39 = vld [vmem:[%s0 + $0x60] sm:$0xff]
    %v40 = vld [vmem:[%s0 + $0x68] sm:$0xff]
    %v41 = vld [vmem:[%s0 + $0x70] sm:$0xff]
    %v42 = vld [vmem:[%s0 + $0x78] sm:$0xff]
    %v43 = vrot.slane %v27, 4
    %v44 = vadd.f32 %v27, %v43
    %v45 = vrot.slane %v44, 2
    %v46 = vadd.f32 %v44, %v45
    %v47 = vrot.slane %v46, 1
    %v48 = vadd.f32 %v46, %v47
    %v49 = vrot.slane %v28, 4
    %v50 = vadd.f32 %v28, %v49
    %v51 = vrot.slane %v50, 2
    %v52 = vadd.f32 %v50, %v51
    %v53 = vrot.slane %v52, 1
    %v54 = vadd.f32 %v52, %v53
    %v55 = vrot.slane %v29, 4
    %v56 = vadd.f32 %v29, %v55
    %v57 = vrot.slane %v56, 2
    %v58 = vadd.f32 %v56, %v57
    %v59 = vrot.slane %v58, 1
    %v60 = vadd.f32 %v58, %v59
    %v61 = vrot.slane %v30, 4
    %v62 = vadd.f32 %v30, %v61
    %v63 = vrot.slane %v62, 2
    %v64 = vadd.f32 %v62, %v63
    %v65 = vrot.slane %v64, 1
    %v66 = vadd.f32 %v64, %v65
    %v67 = vrot.slane %v31, 4
    %v68 = vadd.f32 %v31, %v67
    %v69 = vrot.slane %v68, 2
    %v70 = vadd.f32 %v68, %v69
    %v71 = vrot.slane %v70, 1
    %v72 = vadd.f32 %v70, %v71
    %v73 = vrot.slane %v32, 4
    %v74 = vadd.f32 %v32, %v73
    %v75 = vrot.slane %v74, 2
    %v76 = vadd.f32 %v74, %v75
    %v77 = vrot.slane %v76, 1
    %v78 = vadd.f32 %v76, %v77
    %v79 = vrot.slane %v33, 4
    %v80 = vadd.f32 %v33, %v79
    %v81 = vrot.slane %v80, 2
    %v82 = vadd.f32 %v80, %v81
    %v83 = vrot.slane %v82, 1
    %v84 = vadd.f32 %v82, %v83
    %v85 = vrot.slane %v34, 4
    %v86 = vadd.f32 %v34, %v85
    %v87 = vrot.slane %v86, 2
    %v88 = vadd.f32 %v86, %v87
    %v89 = vrot.slane %v88, 1
    %v90 = vadd.f32 %v88, %v89
    %v91 = vrot.slane %v35, 4
    %v92 = vadd.f32 %v35, %v91
    %v93 = vrot.slane %v92, 2
    %v94 = vadd.f32 %v92, %v93
    %v95 = vrot.slane %v94, 1
    %v96 = vadd.f32 %v94, %v95
    %v97 = vrot.slane %v36, 4
    %v98 = vadd.f32 %v36, %v97
    %v99 = vrot.slane %v98, 2
    %v100 = vadd.f32 %v98, %v99
    %v101 = vrot.slane %v100, 1
    %v102 = vadd.f32 %v100, %v101
    %v103 = vrot.slane %v37, 4
    %v104 = vadd.f32 %v37, %v103
    %v105 = vrot.slane %v104, 2
    %v106 = vadd.f32 %v104, %v105
    %v107 = vrot.slane %v106, 1
    %v108 = vadd.f32 %v106, %v107
    %v109 = vrot.slane %v38, 4
    %v110 = vadd.f32 %v38, %v109
    %v111 = vrot.slane %v110, 2
    %v112 = vadd.f32 %v110, %v111
    %v113 = vrot.slane %v112, 1
    %v114 = vadd.f32 %v112, %v113
    %v115 = vrot.slane %v39, 4
    %v116 = vadd.f32 %v39, %v115
    %v117 = vrot.slane %v116, 2
    %v118 = vadd.f32 %v116, %v117
    %v119 = vrot.slane %v118, 1
    %v120 = vadd.f32 %v118, %v119
    %v121 = vrot.slane %v40, 4
    %v122 = vadd.f32 %v40, %v121
    %v123 = vrot.slane %v122, 2
    %v124 = vadd.f32 %v122, %v123
    %v125 = vrot.slane %v124, 1
    %v126 = vadd.f32 %v124, %v125
    %v127 = vrot.slane %v41, 4
    %v128 = vadd.f32 %v41, %v127
    %v129 = vrot.slane %v128, 2
    %v130 = vadd.f32 %v128, %v129
    %v131 = vrot.slane %v130, 1
    %v132 = vadd.f32 %v130, %v131
    %v133 = vrot.slane %v42, 4
    %v134 = vadd.f32 %v42, %v133
    %v135 = vrot.slane %v134, 2
    %v136 = vadd.f32 %v134, %v135
    %v137 = vrot.slane %v136, 1
    %v138 = vadd.f32 %v136, %v137
    %v139 = vmul.f32 %v48, 0.125
    %v140 = vmul.f32 %v54, 0.125
    %v141 = vmul.f32 %v60, 0.125
    %v142 = vmul.f32 %v66, 0.125
    %v143 = vmul.f32 %v72, 0.125
    %v144 = vmul.f32 %v78, 0.125
    %v145 = vmul.f32 %v84, 0.125
    %v146 = vmul.f32 %v90, 0.125
    %v147 = vmul.f32 %v96, 0.125
    %v148 = vmul.f32 %v102, 0.125
    %v149 = vmul.f32 %v108, 0.125
    %v150 = vmul.f32 %v114, 0.125
    %v151 = vmul.f32 %v120, 0.125
    %v152 = vmul.f32 %v126, 0.125
    %v153 = vmul.f32 %v132, 0.125
    %v154 = vmul.f32 %v138, 0.125
    %v155 = vld [vmem:[%s1] sm:$0xff]
    %v156 = vld [vmem:[%s1 + $0x8] sm:$0xff]
    %v157 = vld [vmem:[%s1 + $0x10] sm:$0xff]
    %v158 = vld [vmem:[%s1 + $0x18] sm:$0xff]
    %v159 = vld [vmem:[%s1 + $0x20] sm:$0xff]
    %v160 = vld [vmem:[%s1 + $0x28] sm:$0xff]
    %v161 = vld [vmem:[%s1 + $0x30] sm:$0xff]
    %v162 = vld [vmem:[%s1 + $0x38] sm:$0xff]
    %v163 = vld [vmem:[%s1 + $0x40] sm:$0xff]
    %v164 = vld [vmem:[%s1 + $0x48] sm:$0xff]
    %v165 = vld [vmem:[%s1 + $0x50] sm:$0xff]
    %v166 = vld [vmem:[%s1 + $0x58] sm:$0xff]
    %v167 = vld [vmem:[%s1 + $0x60] sm:$0xff]
    %v168 = vld [vmem:[%s1 + $0x68] sm:$0xff]
    %v169 = vld [vmem:[%s1 + $0x70] sm:$0xff]
    %v170 = vld [vmem:[%s1 + $0x78] sm:$0xff]
    %v171 = vrot.slane %v155, 4
    %v172 = vadd.f32 %v155, %v171
    %v173 = vrot.slane %v172, 2
    %v174 = vadd.f32 %v172, %v173
    %v175 = vrot.slane %v174, 1
    %v176 = vadd.f32 %v174, %v175
    %v177 = vrot.slane %v156, 4
    %v178 = vadd.f32 %v156, %v177
    %v179 = vrot.slane %v178, 2
    %v180 = vadd.f32 %v178, %v179
    %v181 = vrot.slane %v180, 1
    %v182 = vadd.f32 %v180, %v181
    %v183 = vrot.slane %v157, 4
    %v184 = vadd.f32 %v157, %v183
    %v185 = vrot.slane %v184, 2
    %v186 = vadd.f32 %v184, %v185
    %v187 = vrot.slane %v186, 1
    %v188 = vadd.f32 %v186, %v187
    %v189 = vrot.slane %v158, 4
    %v190 = vadd.f32 %v158, %v189
    %v191 = vrot.slane %v190, 2
    %v192 = vadd.f32 %v190, %v191
    %v193 = vrot.slane %v192, 1
    %v194 = vadd.f32 %v192, %v193
    %v195 = vrot.slane %v159, 4
    %v196 = vadd.f32 %v159, %v195
    %v197 = vrot.slane %v196, 2
    %v198 = vadd.f32 %v196, %v197
    %v199 = vrot.slane %v198, 1
    %v200 = vadd.f32 %v198, %v199
    %v201 = vrot.slane %v160, 4
    %v202 = vadd.f32 %v160, %v201
    %v203 = vrot.slane %v202, 2
    %v204 = vadd.f32 %v202, %v203
    %v205 = vrot.slane %v204, 1
    %v206 = vadd.f32 %v204, %v205
    %v207 = vrot.slane %v161, 4
    %v208 = vadd.f32 %v161, %v207
    %v209 = vrot.slane %v208, 2
    %v210 = vadd.f32 %v208, %v209
    %v211 = vrot.slane %v210, 1
    %v212 = vadd.f32 %v210, %v211
    %v213 = vrot.slane %v162, 4
    %v214 = vadd.f32 %v162, %v213
    %v215 = vrot.slane %v214, 2
    %v216 = vadd.f32 %v214, %v215
    %v217 = vrot.slane %v216, 1
    %v218 = vadd.f32 %v216, %v217
    %v219 = vrot.slane %v163, 4
    %v220 = vadd.f32 %v163, %v219
    %v221 = vrot.slane %v220, 2
    %v222 = vadd.f32 %v220, %v221
    %v223 = vrot.slane %v222, 1
    %v224 = vadd.f32 %v222, %v223
    %v225 = vrot.slane %v164, 4
    %v226 = vadd.f32 %v164, %v225
    %v227 = vrot.slane %v226, 2
    %v228 = vadd.f32 %v226, %v227
    %v229 = vrot.slane %v228, 1
    %v230 = vadd.f32 %v228, %v229
    %v231 = vrot.slane %v165, 4
    %v232 = vadd.f32 %v165, %v231
    %v233 = vrot.slane %v232, 2
    %v234 = vadd.f32 %v232, %v233
    %v235 = vrot.slane %v234, 1
    %v236 = vadd.f32 %v234, %v235
    %v237 = vrot.slane %v166, 4
    %v238 = vadd.f32 %v166, %v237
    %v239 = vrot.slane %v238, 2
    %v240 = vadd.f32 %v238, %v239
    %v241 = vrot.slane %v240, 1
    %v242 = vadd.f32 %v240, %v241
    %v243 = vrot.slane %v167, 4
    %v244 = vadd.f32 %v167, %v243
    %v245 = vrot.slane %v244, 2
    %v246 = vadd.f32 %v244, %v245
    %v247 = vrot.slane %v246, 1
    %v248 = vadd.f32 %v246, %v247
    %v249 = vrot.slane %v168, 4
    %v250 = vadd.f32 %v168, %v249
    %v251 = vrot.slane %v250, 2
    %v252 = vadd.f32 %v250, %v251
    %v253 = vrot.slane %v252, 1
    %v254 = vadd.f32 %v252, %v253
    %v255 = vrot.slane %v169, 4
    %v256 = vadd.f32 %v169, %v255
    %v257 = vrot.slane %v256, 2
    %v258 = vadd.f32 %v256, %v257
    %v259 = vrot.slane %v258, 1
    %v260 = vadd.f32 %v258, %v259
    %v261 = vrot.slane %v170, 4
    %v262 = vadd.f32 %v170, %v261
    %v263 = vrot.slane %v262, 2
    %v264 = vadd.f32 %v262, %v263
    %v265 = vrot.slane %v264, 1
    %v266 = vadd.f32 %v264, %v265
    %v267 = vmul.f32 %v176, 0.125
    %v268 = vmul.f32 %v182, 0.125
    %v269 = vmul.f32 %v188, 0.125
    %v270 = vmul.f32 %v194, 0.125
    %v271 = vmul.f32 %v200, 0.125
    %v272 = vmul.f32 %v206, 0.125
    %v273 = vmul.f32 %v212, 0.125
    %v274 = vmul.f32 %v218, 0.125
    %v275 = vmul.f32 %v224, 0.125
    %v276 = vmul.f32 %v230, 0.125
    %v277 = vmul.f32 %v236, 0.125
    %v278 = vmul.f32 %v242, 0.125
    %v279 = vmul.f32 %v248, 0.125
    %v280 = vmul.f32 %v254, 0.125
    %v281 = vmul.f32 %v260, 0.125
    %v282 = vmul.f32 %v266, 0.125
    %v283 = vld [vmem:[%s2] sm:$0xff]
    %v284 = vld [vmem:[%s2 + $0x8] sm:$0xff]
    %v285 = vld [vmem:[%s2 + $0x10] sm:$0xff]
    %v286 = vld [vmem:[%s2 + $0x18] sm:$0xff]
    %v287 = vld [vmem:[%s2 + $0x20] sm:$0xff]
    %v288 = vld [vmem:[%s2 + $0x28] sm:$0xff]
    %v289 = vld [vmem:[%s2 + $0x30] sm:$0xff]
    %v290 = vld [vmem:[%s2 + $0x38] sm:$0xff]
    %v291 = vld [vmem:[%s2 + $0x40] sm:$0xff]
    %v292 = vld [vmem:[%s2 + $0x48] sm:$0xff]
    %v293 = vld [vmem:[%s2 + $0x50] sm:$0xff]
    %v294 = vld [vmem:[%s2 + $0x58] sm:$0xff]
    %v295 = vld [vmem:[%s2 + $0x60] sm:$0xff]
    %v296 = vld [vmem:[%s2 + $0x68] sm:$0xff]
    %v297 = vld [vmem:[%s2 + $0x70] sm:$0xff]
    %v298 = vld [vmem:[%s2 + $0x78] sm:$0xff]
    %v299 = vrot.slane %v283, 4
    %v300 = vadd.f32 %v283, %v299
    %v301 = vrot.slane %v300, 2
    %v302 = vadd.f32 %v300, %v301
    %v303 = vrot.slane %v302, 1
    %v304 = vadd.f32 %v302, %v303
    %v305 = vrot.slane %v284, 4
    %v306 = vadd.f32 %v284, %v305
    %v307 = vrot.slane %v306, 2
    %v308 = vadd.f32 %v306, %v307
    %v309 = vrot.slane %v308, 1
    %v310 = vadd.f32 %v308, %v309
    %v311 = vrot.slane %v285, 4
    %v312 = vadd.f32 %v285, %v311
    %v313 = vrot.slane %v312, 2
    %v314 = vadd.f32 %v312, %v313
    %v315 = vrot.slane %v314, 1
    %v316 = vadd.f32 %v314, %v315
    %v317 = vrot.slane %v286, 4
    %v318 = vadd.f32 %v286, %v317
    %v319 = vrot.slane %v318, 2
    %v320 = vadd.f32 %v318, %v319
    %v321 = vrot.slane %v320, 1
    %v322 = vadd.f32 %v320, %v321
    %v323 = vrot.slane %v287, 4
    %v324 = vadd.f32 %v287, %v323
    %v325 = vrot.slane %v324, 2
    %v326 = vadd.f32 %v324, %v325
    %v327 = vrot.slane %v326, 1
    %v328 = vadd.f32 %v326, %v327
    %v329 = vrot.slane %v288, 4
    %v330 = vadd.f32 %v288, %v329
    %v331 = vrot.slane %v330, 2
    %v332 = vadd.f32 %v330, %v331
    %v333 = vrot.slane %v332, 1
    %v334 = vadd.f32 %v332, %v333
    %v335 = vrot.slane %v289, 4
    %v336 = vadd.f32 %v289, %v335
    %v337 = vrot.slane %v336, 2
    %v338 = vadd.f32 %v336, %v337
    %v339 = vrot.slane %v338, 1
    %v340 = vadd.f32 %v338, %v339
    %v341 = vrot.slane %v290, 4
    %v342 = vadd.f32 %v290, %v341
    %v343 = vrot.slane %v342, 2
    %v344 = vadd.f32 %v342, %v343
    %v345 = vrot.slane %v344, 1
    %v346 = vadd.f32 %v344, %v345
    %v347 = vrot.slane %v291, 4
    %v348 = vadd.f32 %v291, %v347
    %v349 = vrot.slane %v348, 2
    %v350 = vadd.f32 %v348, %v349
    %v351 = vrot.slane %v350, 1
    %v352 = vadd.f32 %v350, %v351
    %v353 = vrot.slane %v292, 4
    %v354 = vadd.f32 %v292, %v353
    %v355 = vrot.slane %v354, 2
    %v356 = vadd.f32 %v354, %v355
    %v357 = vrot.slane %v356, 1
    %v358 = vadd.f32 %v356, %v357
    %v359 = vrot.slane %v293, 4
    %v360 = vadd.f32 %v293, %v359
    %v361 = vrot.slane %v360, 2
    %v362 = vadd.f32 %v360, %v361
    %v363 = vrot.slane %v362, 1
    %v364 = vadd.f32 %v362, %v363
    %v365 = vrot.slane %v294, 4
    %v366 = vadd.f32 %v294, %v365
    %v367 = vrot.slane %v366, 2
    %v368 = vadd.f32 %v366, %v367
    %v369 = vrot.slane %v368, 1
    %v370 = vadd.f32 %v368, %v369
    %v371 = vrot.slane %v295, 4
    %v372 = vadd.f32 %v295, %v371
    %v373 = vrot.slane %v372, 2
    %v374 = vadd.f32 %v372, %v373
    %v375 = vrot.slane %v374, 1
    %v376 = vadd.f32 %v374, %v375
    %v377 = vrot.slane %v296, 4
    %v378 = vadd.f32 %v296, %v377
    %v379 = vrot.slane %v378, 2
    %v380 = vadd.f32 %v378, %v379
    %v381 = vrot.slane %v380, 1
    %v382 = vadd.f32 %v380, %v381
    %v383 = vrot.slane %v297, 4
    %v384 = vadd.f32 %v297, %v383
    %v385 = vrot.slane %v384, 2
    %v386 = vadd.f32 %v384, %v385
    %v387 = vrot.slane %v386, 1
    %v388 = vadd.f32 %v386, %v387
    %v389 = vrot.slane %v298, 4
    %v390 = vadd.f32 %v298, %v389
    %v391 = vrot.slane %v390, 2
    %v392 = vadd.f32 %v390, %v391
    %v393 = vrot.slane %v392, 1
    %v394 = vadd.f32 %v392, %v393
    %v395 = vmul.f32 %v304, 0.125
    %v396 = vmul.f32 %v310, 0.125
    %v397 = vmul.f32 %v316, 0.125
    %v398 = vmul.f32 %v322, 0.125
    %v399 = vmul.f32 %v328, 0.125
    %v400 = vmul.f32 %v334, 0.125
    %v401 = vmul.f32 %v340, 0.125
    %v402 = vmul.f32 %v346, 0.125
    %v403 = vmul.f32 %v352, 0.125
    %v404 = vmul.f32 %v358, 0.125
    %v405 = vmul.f32 %v364, 0.125
    %v406 = vmul.f32 %v370, 0.125
    %v407 = vmul.f32 %v376, 0.125
    %v408 = vmul.f32 %v382, 0.125
    %v409 = vmul.f32 %v388, 0.125
    %v410 = vmul.f32 %v394, 0.125
    %vm427 = vcmask 1041409
    %v428 = vsel %vm427, %v147, %v139
    %v429 = vsel %vm427, %v148, %v140
    %v430 = vsel %vm427, %v149, %v141
    %v431 = vsel %vm427, %v150, %v142
    %v432 = vsel %vm427, %v151, %v143
    %v433 = vsel %vm427, %v152, %v144
    %v434 = vsel %vm427, %v153, %v145
    %v435 = vsel %vm427, %v154, %v146
    %vm460 = vcmask 1043459
    %v461 = vsel %vm460, %v275, %v267
    %v462 = vsel %vm460, %v276, %v268
    %v463 = vsel %vm460, %v277, %v269
    %v464 = vsel %vm460, %v278, %v270
    %v465 = vsel %vm460, %v279, %v271
    %v466 = vsel %vm460, %v280, %v272
    %v467 = vsel %vm460, %v281, %v273
    %v468 = vsel %vm460, %v282, %v274
    %vm493 = vcmask 1045509
    %v494 = vsel %vm493, %v403, %v395
    %v495 = vsel %vm493, %v404, %v396
    %v496 = vsel %vm493, %v405, %v397
    %v497 = vsel %vm493, %v406, %v398
    %v498 = vsel %vm493, %v407, %v399
    %v499 = vsel %vm493, %v408, %v400
    %v500 = vsel %vm493, %v409, %v401
    %v501 = vsel %vm493, %v410, %v402
    %vm510 = vcmask 1041408
    %v511 = vsel %vm510, %v428, %v461
    %v512 = vsel %vm510, %v429, %v462
    %v513 = vsel %vm510, %v430, %v463
    %v514 = vsel %vm510, %v431, %v464
    %v515 = vsel %vm510, %v432, %v465
    %v516 = vsel %vm510, %v433, %v466
    %v517 = vsel %vm510, %v434, %v467
    %v518 = vsel %vm510, %v435, %v468
    %vm519 = vcmask 1043456
    %v520 = vsel %vm519, %v511, %v494
    %v521 = vsel %vm519, %v512, %v495
    %v522 = vsel %vm519, %v513, %v496
    %v523 = vsel %vm519, %v514, %v497
    %v524 = vsel %vm519, %v515, %v498
    %v525 = vsel %vm519, %v516, %v499
    %v526 = vsel %vm519, %v517, %v500
    %v527 = vsel %vm519, %v518, %v501
    %v528 = vld [vmem:[%s3] sm:$0xff]
    %v529 = vld [vmem:[%s3 + $0x8] sm:$0xff]
    %v530 = vld [vmem:[%s3 + $0x10] sm:$0xff]
    %v531 = vld [vmem:[%s3 + $0x18] sm:$0xff]
    %v532 = vld [vmem:[%s3 + $0x20] sm:$0xff]
    %v533 = vld [vmem:[%s3 + $0x28] sm:$0xff]
    %v534 = vld [vmem:[%s3 + $0x30] sm:$0xff]
    %v535 = vld [vmem:[%s3 + $0x38] sm:$0xff]
    %v536 = vld [vmem:[%s3 + $0x40] sm:$0xff]
    %v537 = vld [vmem:[%s3 + $0x48] sm:$0xff]
    %v538 = vld [vmem:[%s3 + $0x50] sm:$0xff]
    %v539 = vld [vmem:[%s3 + $0x58] sm:$0xff]
    %v540 = vld [vmem:[%s3 + $0x60] sm:$0xff]
    %v541 = vld [vmem:[%s3 + $0x68] sm:$0xff]
    %v542 = vld [vmem:[%s3 + $0x70] sm:$0xff]
    %v543 = vld [vmem:[%s3 + $0x78] sm:$0xff]
    %v544 = vld [vmem:[%s3 + $0x80] sm:$0xff]
    %v545 = vld [vmem:[%s3 + $0x88] sm:$0xff]
    %v546 = vld [vmem:[%s3 + $0x90] sm:$0xff]
    %v547 = vld [vmem:[%s3 + $0x98] sm:$0xff]
    %v548 = vld [vmem:[%s3 + $0xa0] sm:$0xff]
    %v549 = vld [vmem:[%s3 + $0xa8] sm:$0xff]
    %v550 = vld [vmem:[%s3 + $0xb0] sm:$0xff]
    %v551 = vld [vmem:[%s3 + $0xb8] sm:$0xff]
    %v552 = vld [vmem:[%s3 + $0xc0] sm:$0xff]
    %v553 = vld [vmem:[%s3 + $0xc8] sm:$0xff]
    %v554 = vld [vmem:[%s3 + $0xd0] sm:$0xff]
    %v555 = vld [vmem:[%s3 + $0xd8] sm:$0xff]
    %v556 = vld [vmem:[%s3 + $0xe0] sm:$0xff]
    %v557 = vld [vmem:[%s3 + $0xe8] sm:$0xff]
    %v558 = vld [vmem:[%s3 + $0xf0] sm:$0xff]
    %v559 = vld [vmem:[%s3 + $0xf8] sm:$0xff]
    %v560 = vld [vmem:[%s3 + $0x100] sm:$0xff]
    %v561 = vld [vmem:[%s3 + $0x108] sm:$0xff]
    %v562 = vld [vmem:[%s3 + $0x110] sm:$0xff]
    %v563 = vld [vmem:[%s3 + $0x118] sm:$0xff]
    %v564 = vld [vmem:[%s3 + $0x120] sm:$0xff]
    %v565 = vld [vmem:[%s3 + $0x128] sm:$0xff]
    %v566 = vld [vmem:[%s3 + $0x130] sm:$0xff]
    %v567 = vld [vmem:[%s3 + $0x138] sm:$0xff]
    %v568 = vld [vmem:[%s3 + $0x140] sm:$0xff]
    %v569 = vld [vmem:[%s3 + $0x148] sm:$0xff]
    %v570 = vld [vmem:[%s3 + $0x150] sm:$0xff]
    %v571 = vld [vmem:[%s3 + $0x158] sm:$0xff]
    %v572 = vld [vmem:[%s3 + $0x160] sm:$0xff]
    %v573 = vld [vmem:[%s3 + $0x168] sm:$0xff]
    %v574 = vld [vmem:[%s3 + $0x170] sm:$0xff]
    %v575 = vld [vmem:[%s3 + $0x178] sm:$0xff]
    %v576 = vld [vmem:[%s3 + $0x180] sm:$0xff]
    %v577 = vld [vmem:[%s3 + $0x188] sm:$0xff]
    %v578 = vld [vmem:[%s3 + $0x190] sm:$0xff]
    %v579 = vld [vmem:[%s3 + $0x198] sm:$0xff]
    %v580 = vld [vmem:[%s3 + $0x1a0] sm:$0xff]
    %v581 = vld [vmem:[%s3 + $0x1a8] sm:$0xff]
    %v582 = vld [vmem:[%s3 + $0x1b0] sm:$0xff]
    %v583 = vld [vmem:[%s3 + $0x1b8] sm:$0xff]
    %v584 = vld [vmem:[%s3 + $0x1c0] sm:$0xff]
    %v585 = vld [vmem:[%s3 + $0x1c8] sm:$0xff]
    %v586 = vld [vmem:[%s3 + $0x1d0] sm:$0xff]
    %v587 = vld [vmem:[%s3 + $0x1d8] sm:$0xff]
    %v588 = vld [vmem:[%s3 + $0x1e0] sm:$0xff]
    %v589 = vld [vmem:[%s3 + $0x1e8] sm:$0xff]
    %v590 = vld [vmem:[%s3 + $0x1f0] sm:$0xff]
    %v591 = vld [vmem:[%s3 + $0x1f8] sm:$0xff]
    %v592 = vld [vmem:[%s3 + $0x200] sm:$0xff]
    %v593 = vld [vmem:[%s3 + $0x208] sm:$0xff]
    %v594 = vld [vmem:[%s3 + $0x210] sm:$0xff]
    %v595 = vld [vmem:[%s3 + $0x218] sm:$0xff]
    %v596 = vld [vmem:[%s3 + $0x220] sm:$0xff]
    %v597 = vld [vmem:[%s3 + $0x228] sm:$0xff]
    %v598 = vld [vmem:[%s3 + $0x230] sm:$0xff]
    %v599 = vld [vmem:[%s3 + $0x238] sm:$0xff]
    %v600 = vld [vmem:[%s3 + $0x240] sm:$0xff]
    %v601 = vld [vmem:[%s3 + $0x248] sm:$0xff]
    %v602 = vld [vmem:[%s3 + $0x250] sm:$0xff]
    %v603 = vld [vmem:[%s3 + $0x258] sm:$0xff]
    %v604 = vld [vmem:[%s3 + $0x260] sm:$0xff]
    %v605 = vld [vmem:[%s3 + $0x268] sm:$0xff]
    %v606 = vld [vmem:[%s3 + $0x270] sm:$0xff]
    %v607 = vld [vmem:[%s3 + $0x278] sm:$0xff]
    %v608 = vld [vmem:[%s3 + $0x280] sm:$0xff]
    %v609 = vld [vmem:[%s3 + $0x288] sm:$0xff]
    %v610 = vld [vmem:[%s3 + $0x290] sm:$0xff]
    %v611 = vld [vmem:[%s3 + $0x298] sm:$0xff]
    %v612 = vld [vmem:[%s3 + $0x2a0] sm:$0xff]
    %v613 = vld [vmem:[%s3 + $0x2a8] sm:$0xff]
    %v614 = vld [vmem:[%s3 + $0x2b0] sm:$0xff]
    %v615 = vld [vmem:[%s3 + $0x2b8] sm:$0xff]
    %v616 = vld [vmem:[%s3 + $0x2c0] sm:$0xff]
    %v617 = vld [vmem:[%s3 + $0x2c8] sm:$0xff]
    %v618 = vld [vmem:[%s3 + $0x2d0] sm:$0xff]
    %v619 = vld [vmem:[%s3 + $0x2d8] sm:$0xff]
    %v620 = vld [vmem:[%s3 + $0x2e0] sm:$0xff]
    %v621 = vld [vmem:[%s3 + $0x2e8] sm:$0xff]
    %v622 = vld [vmem:[%s3 + $0x2f0] sm:$0xff]
    %v623 = vld [vmem:[%s3 + $0x2f8] sm:$0xff]
    %v624 = vld [vmem:[%s3 + $0x300] sm:$0xff]
    %v625 = vld [vmem:[%s3 + $0x308] sm:$0xff]
    %v626 = vld [vmem:[%s3 + $0x310] sm:$0xff]
    %v627 = vld [vmem:[%s3 + $0x318] sm:$0xff]
    %v628 = vld [vmem:[%s3 + $0x320] sm:$0xff]
    %v629 = vld [vmem:[%s3 + $0x328] sm:$0xff]
    %v630 = vld [vmem:[%s3 + $0x330] sm:$0xff]
    %v631 = vld [vmem:[%s3 + $0x338] sm:$0xff]
    %v632 = vld [vmem:[%s3 + $0x340] sm:$0xff]
    %v633 = vld [vmem:[%s3 + $0x348] sm:$0xff]
    %v634 = vld [vmem:[%s3 + $0x350] sm:$0xff]
    %v635 = vld [vmem:[%s3 + $0x358] sm:$0xff]
    %v636 = vld [vmem:[%s3 + $0x360] sm:$0xff]
    %v637 = vld [vmem:[%s3 + $0x368] sm:$0xff]
    %v638 = vld [vmem:[%s3 + $0x370] sm:$0xff]
    %v639 = vld [vmem:[%s3 + $0x378] sm:$0xff]
    %v640 = vld [vmem:[%s3 + $0x380] sm:$0xff]
    %v641 = vld [vmem:[%s3 + $0x388] sm:$0xff]
    %v642 = vld [vmem:[%s3 + $0x390] sm:$0xff]
    %v643 = vld [vmem:[%s3 + $0x398] sm:$0xff]
    %v644 = vld [vmem:[%s3 + $0x3a0] sm:$0xff]
    %v645 = vld [vmem:[%s3 + $0x3a8] sm:$0xff]
    %v646 = vld [vmem:[%s3 + $0x3b0] sm:$0xff]
    %v647 = vld [vmem:[%s3 + $0x3b8] sm:$0xff]
    %v648 = vld [vmem:[%s3 + $0x3c0] sm:$0xff]
    %v649 = vld [vmem:[%s3 + $0x3c8] sm:$0xff]
    %v650 = vld [vmem:[%s3 + $0x3d0] sm:$0xff]
    %v651 = vld [vmem:[%s3 + $0x3d8] sm:$0xff]
    %v652 = vld [vmem:[%s3 + $0x3e0] sm:$0xff]
    %v653 = vld [vmem:[%s3 + $0x3e8] sm:$0xff]
    %v654 = vld [vmem:[%s3 + $0x3f0] sm:$0xff]
    %v655 = vld [vmem:[%s3 + $0x3f8] sm:$0xff]
    %v656 = vld [vmem:[%s4] sm:$0x1]
    %v658 = vperm.slane %v656, 0
    %660 = vmatpush.msra.mxu0 %v543
    %661 = vmatpush.msra.mxu0 %v542
    %662 = vmatpush.msra.mxu0 %v541
    %663 = vmatpush.msra.mxu0 %v540
    %664 = vmatpush.msra.mxu0 %v539
    %665 = vmatpush.msra.mxu0 %v538
    %666 = vmatpush.msra.mxu0 %v537
    %667 = vmatpush.msra.mxu0 %v536
    %668 = vmatpush.msra.mxu0 %v535
    %669 = vmatpush.msra.mxu0 %v534
    %670 = vmatpush.msra.mxu0 %v533
    %671 = vmatpush.msra.mxu0 %v532
    %672 = vmatpush.msra.mxu0 %v531
    %673 = vmatpush.msra.mxu0 %v530
    %674 = vmatpush.msra.mxu0 %v529
    %675 = vmatpush.msra.mxu0 %v528
    %676 = vmatmul.f32.gmra.mxu0 %v520
    %v677 = vpop.f32.mrf.mxu0
    %v678 = vadd.f32 %v658, %v677
    %679 = vdwg.mxu0
    %680 = vmatpush.msra.mxu0 %v559
    %681 = vmatpush.msra.mxu0 %v558
    %682 = vmatpush.msra.mxu0 %v557
    %683 = vmatpush.msra.mxu0 %v556
    %684 = vmatpush.msra.mxu0 %v555
    %685 = vmatpush.msra.mxu0 %v554
    %686 = vmatpush.msra.mxu0 %v553
    %687 = vmatpush.msra.mxu0 %v552
    %688 = vmatpush.msra.mxu0 %v551
    %689 = vmatpush.msra.mxu0 %v550
    %690 = vmatpush.msra.mxu0 %v549
    %691 = vmatpush.msra.mxu0 %v548
    %692 = vmatpush.msra.mxu0 %v547
    %693 = vmatpush.msra.mxu0 %v546
    %694 = vmatpush.msra.mxu0 %v545
    %695 = vmatpush.msra.mxu0 %v544
    %696 = vmatmul.f32.gmra.mxu0 %v521
    %v697 = vpop.f32.mrf.mxu0
    %v698 = vadd.f32 %v678, %v697
    %699 = vdwg.mxu0
    %700 = vmatpush.msra.mxu0 %v575
    %701 = vmatpush.msra.mxu0 %v574
    %702 = vmatpush.msra.mxu0 %v573
    %703 = vmatpush.msra.mxu0 %v572
    %704 = vmatpush.msra.mxu0 %v571
    %705 = vmatpush.msra.mxu0 %v570
    %706 = vmatpush.msra.mxu0 %v569
    %707 = vmatpush.msra.mxu0 %v568
    %708 = vmatpush.msra.mxu0 %v567
    %709 = vmatpush.msra.mxu0 %v566
    %710 = vmatpush.msra.mxu0 %v565
    %711 = vmatpush.msra.mxu0 %v564
    %712 = vmatpush.msra.mxu0 %v563
    %713 = vmatpush.msra.mxu0 %v562
    %714 = vmatpush.msra.mxu0 %v561
    %715 = vmatpush.msra.mxu0 %v560
    %716 = vmatmul.f32.gmra.mxu0 %v522
    %v717 = vpop.f32.mrf.mxu0
    %v718 = vadd.f32 %v698, %v717
    %719 = vdwg.mxu0
    %720 = vmatpush.msra.mxu0 %v591
    %721 = vmatpush.msra.mxu0 %v590
    %722 = vmatpush.msra.mxu0 %v589
    %723 = vmatpush.msra.mxu0 %v588
    %724 = vmatpush.msra.mxu0 %v587
    %725 = vmatpush.msra.mxu0 %v586
    %726 = vmatpush.msra.mxu0 %v585
    %727 = vmatpush.msra.mxu0 %v584
    %728 = vmatpush.msra.mxu0 %v583
    %729 = vmatpush.msra.mxu0 %v582
    %730 = vmatpush.msra.mxu0 %v581
    %731 = vmatpush.msra.mxu0 %v580
    %732 = vmatpush.msra.mxu0 %v579
    %733 = vmatpush.msra.mxu0 %v578
    %734 = vmatpush.msra.mxu0 %v577
    %735 = vmatpush.msra.mxu0 %v576
    %736 = vmatmul.f32.gmra.mxu0 %v523
    %v737 = vpop.f32.mrf.mxu0
    %v738 = vadd.f32 %v718, %v737
    %739 = vdwg.mxu0
    %740 = vmatpush.msra.mxu0 %v607
    %741 = vmatpush.msra.mxu0 %v606
    %742 = vmatpush.msra.mxu0 %v605
    %743 = vmatpush.msra.mxu0 %v604
    %744 = vmatpush.msra.mxu0 %v603
    %745 = vmatpush.msra.mxu0 %v602
    %746 = vmatpush.msra.mxu0 %v601
    %747 = vmatpush.msra.mxu0 %v600
    %748 = vmatpush.msra.mxu0 %v599
    %749 = vmatpush.msra.mxu0 %v598
    %750 = vmatpush.msra.mxu0 %v597
    %751 = vmatpush.msra.mxu0 %v596
    %752 = vmatpush.msra.mxu0 %v595
    %753 = vmatpush.msra.mxu0 %v594
    %754 = vmatpush.msra.mxu0 %v593
    %755 = vmatpush.msra.mxu0 %v592
    %756 = vmatmul.f32.gmra.mxu0 %v524
    %v757 = vpop.f32.mrf.mxu0
    %v758 = vadd.f32 %v738, %v757
    %759 = vdwg.mxu0
    %760 = vmatpush.msra.mxu0 %v623
    %761 = vmatpush.msra.mxu0 %v622
    %762 = vmatpush.msra.mxu0 %v621
    %763 = vmatpush.msra.mxu0 %v620
    %764 = vmatpush.msra.mxu0 %v619
    %765 = vmatpush.msra.mxu0 %v618
    %766 = vmatpush.msra.mxu0 %v617
    %767 = vmatpush.msra.mxu0 %v616
    %768 = vmatpush.msra.mxu0 %v615
    %769 = vmatpush.msra.mxu0 %v614
    %770 = vmatpush.msra.mxu0 %v613
    %771 = vmatpush.msra.mxu0 %v612
    %772 = vmatpush.msra.mxu0 %v611
    %773 = vmatpush.msra.mxu0 %v610
    %774 = vmatpush.msra.mxu0 %v609
    %775 = vmatpush.msra.mxu0 %v608
    %776 = vmatmul.f32.gmra.mxu0 %v525
    %v777 = vpop.f32.mrf.mxu0
    %v778 = vadd.f32 %v758, %v777
    %779 = vdwg.mxu0
    %780 = vmatpush.msra.mxu0 %v639
    %781 = vmatpush.msra.mxu0 %v638
    %782 = vmatpush.msra.mxu0 %v637
    %783 = vmatpush.msra.mxu0 %v636
    %784 = vmatpush.msra.mxu0 %v635
    %785 = vmatpush.msra.mxu0 %v634
    %786 = vmatpush.msra.mxu0 %v633
    %787 = vmatpush.msra.mxu0 %v632
    %788 = vmatpush.msra.mxu0 %v631
    %789 = vmatpush.msra.mxu0 %v630
    %790 = vmatpush.msra.mxu0 %v629
    %791 = vmatpush.msra.mxu0 %v628
    %792 = vmatpush.msra.mxu0 %v627
    %793 = vmatpush.msra.mxu0 %v626
    %794 = vmatpush.msra.mxu0 %v625
    %795 = vmatpush.msra.mxu0 %v624
    %796 = vmatmul.f32.gmra.mxu0 %v526
    %v797 = vpop.f32.mrf.mxu0
    %v798 = vadd.f32 %v778, %v797
    %799 = vdwg.mxu0
    %800 = vmatpush.msra.mxu0 %v655
    %801 = vmatpush.msra.mxu0 %v654
    %802 = vmatpush.msra.mxu0 %v653
    %803 = vmatpush.msra.mxu0 %v652
    %804 = vmatpush.msra.mxu0 %v651
    %805 = vmatpush.msra.mxu0 %v650
    %806 = vmatpush.msra.mxu0 %v649
    %807 = vmatpush.msra.mxu0 %v648
    %808 = vmatpush.msra.mxu0 %v647
    %809 = vmatpush.msra.mxu0 %v646
    %810 = vmatpush.msra.mxu0 %v645
    %811 = vmatpush.msra.mxu0 %v644
    %812 = vmatpush.msra.mxu0 %v643
    %813 = vmatpush.msra.mxu0 %v642
    %814 = vmatpush.msra.mxu0 %v641
    %815 = vmatpush.msra.mxu0 %v640
    %816 = vmatmul.f32.gmra.mxu0 %v527
    %v817 = vpop.f32.mrf.mxu0
    %v818 = vadd.f32 %v798, %v817
    %819 = vdwg.mxu0
    %v821 = vrot.slane %v818, 2
    %v823 = vsub.f32 %v818, %v821
    %v824 = vmul.f32 %v823, %v823
    %vm825 = vcmask 254976
    %v826 = vsel %vm825, %v824, 0.0
    %827 = vadd.xlane.f32.xlu0 %v826
    %v828 = vpop.xlane.xlu0 %827
    %v829 = vrsqrt.pop %v828
    %v830 = vmul.f32 %v829, %v828
    %v831 = vmul.f32 %v830, %v829
    %v832 = vmul.f32 0.5, %v831
    %v833 = vsub.f32 1.5, %v832
    %v834 = vmul.f32 %v829, %v833
    %v835 = vmul.f32 %v828, %v834
    %vm836 = vcmp.eq.f32.partialorder %v828, inf
    %v837 = vsel %vm836, %v828, %v835
    %vm838 = vcmp.eq.f32.partialorder %v828, 0.0
    %v839 = vand.u32 %v828, 2147483648
    %v840 = vsel %vm838, %v839, %v837
    %v841 = vrot.slane %v818, 4
    %v843 = vsub.f32 %v818, %v841
    %v844 = vmul.f32 %v843, %v843
    %v845 = vsel %vm825, %v844, 0.0
    %846 = vadd.xlane.f32.xlu0 %v845
    %v847 = vpop.xlane.xlu0 %846
    %v848 = vrsqrt.pop %v847
    %v849 = vmul.f32 %v848, %v847
    %v850 = vmul.f32 %v849, %v848
    %v851 = vmul.f32 0.5, %v850
    %v852 = vsub.f32 1.5, %v851
    %v853 = vmul.f32 %v848, %v852
    %v854 = vmul.f32 %v847, %v853
    %vm855 = vcmp.eq.f32.partialorder %v847, inf
    %v856 = vsel %vm855, %v847, %v854
    %vm857 = vcmp.eq.f32.partialorder %v847, 0.0
    %v858 = vand.u32 %v847, 2147483648
    %v859 = vsel %vm857, %v858, %v856
    %v860 = vld [vmem:[%s5] sm:$0x3]
    %v861 = vsub.f32 1.0, %v860
    %v862 = vadd.f32 %v861, 1e-06
    %v863 = vld [vmem:[%s6] sm:$0x3]
    %v864 = vsub.f32 1.0, %v863
    %v865 = vadd.f32 %v864, 1e-06
    %v866 = vrcp.pop %v865
    %v867 = vmul.f32 %v865, %v866
    %v868 = vsub.f32 1.0, %v867
    %v869 = vmul.f32 %v866, %v868
    %v870 = vadd.f32 %v866, %v869
    %vm871 = vweird.f32 %v865
    %vm872 = vweird.f32 %v866
    %vm873 = vmor %vm871, %vm872
    %v874 = vsel %vm873, %v866, %v870
    %v875 = vand.u32 2147483647, %v865
    %vm876 = vcmp.eq.f32.partialorder %v875, 8.507059e+37
    %v877 = vand.u32 %v865, 2147483648
    %v878 = vor.u32 1.1754944e-38, %v877
    %v879 = vsel %vm876, %v878, %v874
    %v880 = vmul.f32 %v862, %v879
    %v881 = vlog2.pop %v880
    %v882 = vmul.f32 %v881, 0.6931472
    %v883 = vrcp.pop %v859
    %v884 = vmul.f32 %v859, %v883
    %v885 = vsub.f32 1.0, %v884
    %v886 = vmul.f32 %v883, %v885
    %v887 = vadd.f32 %v883, %v886
    %vm888 = vweird.f32 %v859
    %vm889 = vweird.f32 %v883
    %vm890 = vmor %vm888, %vm889
    %v891 = vsel %vm890, %v883, %v887
    %v892 = vand.u32 2147483647, %v859
    %vm893 = vcmp.eq.f32.partialorder %v892, 8.507059e+37
    %v894 = vand.u32 %v859, 2147483648
    %v895 = vor.u32 1.1754944e-38, %v894
    %v896 = vsel %vm893, %v895, %v891
    %v897 = vmul.f32 %v840, %v896
    %v898 = vlog2.pop %v897
    %v899 = vmul.f32 %v898, 0.6931472
    %v900 = vsub.f32 %v899, %v882
    %v901 = vmul.f32 %v900, %v900
    %vm902 = vcmask 1024
    %v903 = vsel %vm902, %v901, 0.0
    %v904 = vrot.slane %v903, 4
    %v905 = vadd.f32 %v903, %v904
    %v906 = vrot.slane %v905, 2
    %v907 = vadd.f32 %v905, %v906
    %v908 = vrot.slane %v907, 1
    %v909 = vadd.f32 %v907, %v908
    %v910 = vmul.f32 %v909, 0.5
    %vm911 = vcmask 0
    %912 = vst.msk [vmem:[#allocation2] sm:$0x1] %vm911, %v910
    // Predicated region
    $region30: #{model_forward.1} parent=1 // pred_check
      _
    $region31: #{model_forward.1} parent=1 // pred_check_branch
      %914 = sbr.rel (0) target = $region33
    $region32: #{model_forward.1} parent=1 // pred_region
      %916 = vsyncadd [#allocation3], 0
      %s918 = sshll.u32 [#allocation2], 4
      %s919 = int_to_ptr.vmem [resolvable:$true] %s918
      %s920 = sshll.u32 %s7, 4
      %s921 = int_to_ptr.hbm [resolvable:$true] %s920
      %923 = dma.vmem_to_hbm [thread:$0]  %s919, 16, %s921, [#allocation3]
    $region33: #{model_forward.1} parent=1 // pred_fallthru
      _
    // Predicated region
    $region34: #{model_forward.1} parent=1 // pred_check
      _
    $region35: #{model_forward.1} parent=1 // pred_check_branch
      %925 = sbr.rel (0) target = $region37
    $region36: #{model_forward.1} parent=1 // pred_region
      %927 = dma.done [#allocation3], 16
    $region37: #{model_forward.1} parent=1 // pred_fallthru
      _
    %928 = vsyncpa [#allocation3], 1

</llo_original>
